<compile_context>
chip_gen: v5e
topology: v5e:2x2
jax: 0.10.0
libtpu: 0.0.40
codegen_flags: <defaults>
</compile_context>

<pallas_src>
import functools

import jax
import jax.numpy as jnp
from jax.experimental import pallas as pl
from jax.experimental.pallas import tpu as pltpu


def _rmsnorm_kernel(x_ref, w_ref, o_ref, *, eps):
    # x_ref: (block_rows, dim) tile in VMEM; w_ref: (1, dim); o_ref: (block_rows, dim)
    x = x_ref[...].astype(jnp.float32)                      # x.float()
    ms = jnp.mean(x * x, axis=-1, keepdims=True)            # pow(2).mean(-1, keepdim=True)
    inv = jax.lax.rsqrt(ms + eps)                           # rsqrt(... + eps)  (EUP slot)
    # PyTorch ordering: downcast the normalized value to x.dtype, THEN multiply
    # by weight (bit-identical for f32 inputs; matches Llama for bf16).
    normed = (x * inv).astype(o_ref.dtype)
    o_ref[...] = normed * w_ref[...].astype(o_ref.dtype)


def _vmem_capacity_bytes():
    """Per-TensorCore VMEM capacity; conservative fallback if query fails."""
    try:
        return int(pltpu.get_tpu_info().vmem_capacity_bytes)
    except Exception:
        return 64 << 20  # v7x per-TC size (most conservative)


def _choose_block_rows(rows, dim, dtype, vmem_cap):
    itemsize = jnp.dtype(dtype).itemsize
    # Sublane packing alignment: 8 rows for 32-bit, 16 for bf16/f16, 32 for 8-bit.
    align = max(8, 32 // itemsize)

    # 64 MiB per-TC VMEM => v7x-class chip with 2 TensorCores per chip.
    multi_tc = vmem_cap <= (64 << 20)

    # Block-dependent VMEM budget (double-buffered in + out + f32 temporaries).
    budget = (24 << 20) if multi_tc else (48 << 20)
    per_row = dim * (4 * itemsize + 8)

    br = max(align, (budget // per_row) // align * align)
    br = min(br, 1024)  # measured HBM roofline saturates around 512-1024 rows

    rows_padded = pl.cdiv(rows, align) * align
    br = min(br, rows_padded)

    if multi_tc:
        # Keep >= 4 grid steps (>= 2 per TensorCore) when rows allow it so the
        # parallel row axis can be sharded across both cores while each still
        # pipelines DMA against compute.
        if rows >= 4 * align:
            br = min(br, max(align, (rows // 4) // align * align))
        # Nudge toward an even step count so the two TensorCores get balanced work.
        steps = pl.cdiv(rows, br)
        if steps > 1 and steps % 2 == 1:
            steps += 1
            br = min(br, max(align, pl.cdiv(pl.cdiv(rows, steps), align) * align))

    return int(br), itemsize, multi_tc


def rmsnorm(x, weight, eps=1e-6, block_rows=None):
    """RMSNorm over the last axis: ((x.float() * rsqrt(mean(x^2,-1)+eps)).astype(x.dtype)) * weight."""
    orig_shape = x.shape
    dim = orig_shape[-1]
    x2d = x.reshape(-1, dim)
    rows = x2d.shape[0]

    vmem_cap = _vmem_capacity_bytes()
    if block_rows is None:
        block_rows, itemsize, _ = _choose_block_rows(rows, dim, x.dtype, vmem_cap)
    else:
        itemsize = jnp.dtype(x.dtype).itemsize

    # No wrapper-side padding copy: the ragged trailing block is masked on writeback.
    grid = (pl.cdiv(rows, block_rows),)

    # Scoped-VMEM limit sized to the chosen tiles (in/out double-buffered plus
    # f32 temporaries) with headroom; never pinned at physical capacity.
    block_bytes = block_rows * dim * (4 * itemsize + 12)
    if vmem_cap <= (64 << 20):
        cap = min(vmem_cap - (16 << 20), 48 << 20)     # v7x: leave >= 16 MiB headroom
    else:
        cap = min(vmem_cap - (16 << 20), 112 << 20)    # v5e/v6e (128 MiB VMEM)
    cap = max(cap, 16 << 20)
    vmem_limit = int(min(max(block_bytes + 2 * dim * 4 + (4 << 20), 16 << 20), cap))

    w2d = weight.reshape(1, dim)

    out = pl.pallas_call(
        functools.partial(_rmsnorm_kernel, eps=eps),
        out_shape=jax.ShapeDtypeStruct((rows, dim), x.dtype),
        grid_spec=pltpu.PrefetchScalarGridSpec(
            num_scalar_prefetch=0,
            grid=grid,
            in_specs=[
                pl.BlockSpec((block_rows, dim), lambda i: (i, 0)),
                # Constant-index weight block: resident across the whole grid
                # (not re-DMA'd per step).
                pl.BlockSpec((1, dim), lambda i: (0, 0)),
            ],
            out_specs=pl.BlockSpec((block_rows, dim), lambda i: (i, 0)),
        ),
        compiler_params=pltpu.CompilerParams(
            dimension_semantics=("parallel",),
            vmem_limit_bytes=vmem_limit),
    )(x2d, w2d)

    return out.reshape(orig_shape)


if __name__ == "__main__":
    key = jax.random.PRNGKey(0)
    eps = 1e-6

    def ref_rmsnorm(x, weight):
        xf = x.astype(jnp.float32)
        normed = (xf * jax.lax.rsqrt(
            jnp.mean(xf * xf, axis=-1, keepdims=True) + eps)).astype(x.dtype)
        return normed * weight

    # Case 1: module-default init (weight = ones), small llama-like shape.
    batch, seq, dim = 2, 8, 128
    x = jax.random.normal(key, (batch, seq, dim), dtype=jnp.float32)
    weight = jnp.ones((dim,), dtype=jnp.float32)   # nn.Parameter(torch.ones(dim))
    out = jax.block_until_ready(rmsnorm(x, weight, eps=eps))
    assert out.shape == x.shape
    assert jnp.allclose(out, ref_rmsnorm(x, weight), atol=1e-5, rtol=1e-5), \
        "mismatch vs reference (case 1)"

    # Case 2: non-trivial weight, auto-chosen block (grid == 1 path).
    k1, k2 = jax.random.split(key)
    x2 = jax.random.normal(k1, (3, 5, dim), dtype=jnp.float32)
    w2 = jax.random.normal(k2, (dim,), dtype=jnp.float32)
    out2 = jax.block_until_ready(rmsnorm(x2, w2, eps=eps))
    assert jnp.allclose(out2, ref_rmsnorm(x2, w2), atol=1e-5, rtol=1e-5), \
        "mismatch vs reference (case 2)"

    # Case 3: grid > 1 with a ragged trailing block (rows=22, block_rows=8 ->
    # 3 grid steps, last block partial) to confirm masked writeback drops the
    # OOB rows and no stale-VMEM garbage leaks into the output.
    k3, k4 = jax.random.split(k2)
    x3 = jax.random.normal(k3, (2, 11, dim), dtype=jnp.float32)
    w3 = jax.random.normal(k4, (dim,), dtype=jnp.float32)
    out3 = jax.block_until_ready(rmsnorm(x3, w3, eps=eps, block_rows=8))
    assert jnp.allclose(out3, ref_rmsnorm(x3, w3), atol=1e-5, rtol=1e-5), \
        "mismatch vs reference (case 3, ragged grid>1)"

    print("KERNEL_OK")
</pallas_src>

<mosaic_0001>
module attributes {stable_mosaic.version = 11 : i64} {
  func.func @_rmsnorm_kernel(%arg0: i32, %arg1: memref<16x128xf32, #tpu.memory_space<vmem>>, %arg2: memref<1x128xf32, #tpu.memory_space<vmem>>, %arg3: memref<16x128xf32, #tpu.memory_space<vmem>>) attributes {dimension_semantics = [#tpu.dimension_semantics<parallel>], iteration_bounds = array<i64: 1>, scalar_prefetch = 0 : i64, scratch_operands = 0 : i64, tpu.core_type = #tpu.core_type<tc>, window_params = [{transform_indices = @transform_0, window_bounds = array<i64: 16, 128>}, {pipeline_mode = #tpu.pipeline_mode<synchronous>, transform_indices = @transform_1, window_bounds = array<i64: 1, 128>}, {transform_indices = @transform_2, window_bounds = array<i64: 16, 128>}]} {
    %c0 = arith.constant 0 : index
    %c0_0 = arith.constant 0 : index
    %0 = vector.load %arg1[%c0, %c0_0] : memref<16x128xf32, #tpu.memory_space<vmem>>, vector<16x128xf32>
    %1 = arith.mulf %0, %0 : vector<16x128xf32>
    %cst = arith.constant dense<0.000000e+00> : vector<16xf32>
    %2 = vector.multi_reduction <add>, %1, %cst [1] : vector<16x128xf32> to vector<16xf32>
    %3 = vector.shape_cast %2 : vector<16xf32> to vector<16x1xf32>
    %cst_1 = arith.constant 1.280000e+02 : f32
    %4 = vector.broadcast %cst_1 : f32 to vector<16x1xf32>
    %5 = arith.divf %3, %4 : vector<16x1xf32>
    %cst_2 = arith.constant 9.99999997E-7 : f32
    %6 = vector.broadcast %cst_2 : f32 to vector<16x1xf32>
    %7 = arith.addf %5, %6 : vector<16x1xf32>
    %8 = math.rsqrt %7 : vector<16x1xf32>
    %9 = vector.broadcast %8 : vector<16x1xf32> to vector<16x128xf32>
    %10 = arith.mulf %0, %9 : vector<16x128xf32>
    %c0_3 = arith.constant 0 : index
    %c0_4 = arith.constant 0 : index
    %11 = vector.load %arg2[%c0_3, %c0_4] : memref<1x128xf32, #tpu.memory_space<vmem>>, vector<1x128xf32>
    %12 = vector.broadcast %11 : vector<1x128xf32> to vector<16x128xf32>
    %13 = arith.mulf %10, %12 : vector<16x128xf32>
    %c0_5 = arith.constant 0 : index
    %c0_6 = arith.constant 0 : index
    %14 = vector.load %arg3[%c0_5, %c0_6] : memref<16x128xf32, #tpu.memory_space<vmem>>, vector<16x128xf32>
    tpu.vector_store %arg3[%c0_5, %c0_6], %13 {strides = array<i32>} : memref<16x128xf32, #tpu.memory_space<vmem>>, vector<16x128xf32>,
    return
  }
  func.func @transform_0(%arg0: i32) -> (i32, i32) {
    %c0_i32 = arith.constant 0 : i32
    %c0_i32_0 = arith.constant 0 : i32
    return %arg0, %c0_i32 : i32, i32
  }
  func.func @transform_1(%arg0: i32) -> (i32, i32) {
    %c0_i32 = arith.constant 0 : i32
    %c0_i32_0 = arith.constant 0 : i32
    %c0_i32_1 = arith.constant 0 : i32
    return %c0_i32, %c0_i32_0 : i32, i32
  }
  func.func @transform_2(%arg0: i32) -> (i32, i32) {
    %c0_i32 = arith.constant 0 : i32
    %c0_i32_0 = arith.constant 0 : i32
    return %arg0, %c0_i32 : i32, i32
  }
}

</mosaic_0001>

<llo_original>
// kernel: tpu_custom_call.1
$region0: #{tpu_custom_call.1}
  #allocation0 [shape = 'u32[]', space=smem, size = 0x4, offset = 0x4, fixed_abs, tag = 'smem constant byte address 0x4 - core index']
  #allocation1 [shape = 'u32[72,128]{1,0:T(1,128)}', space=vmem, size = 0x9000, scoped, tag = 'internal scratch']
  %s0 = inlined_call_operand.hbm [shape: f32[16,128], index: 0, kind: input, shape index: {}]
  %s1 = inlined_call_operand.hbm [shape: f32[1,128], index: 1, kind: input, shape index: {}]
  %s2 = inlined_call_operand.hbm [shape: f32[16,128], index: 2, kind: output, shape index: {}]
  %s3 = sld [smem:[#allocation0]]
  $region26: #{tpu_custom_call.1} parent=0
    _
  %s5 = ssub.s32 1, %s3
  %s6 = scalar_select 0, %s5, %s3
  $region1: #{tpu_custom_call.1} parent=0
    #allocation2 [shape = 'u8[8192]{0}', space=vmem, size = 0x2000, scoped, tag = 'input window, operand 0, single buffered']
    #allocation3 [shape = 's32[1]{0}', space=sflag, size = 0x4, scoped, tag = 'scoped memory for tpu_custom_call.1']
    #allocation4 [shape = 's32[1]{0}', space=sflag, size = 0x4, scoped, tag = 'scoped memory for tpu_custom_call.1']
    #allocation5 [shape = 'u8[512]{0}', space=vmem, size = 0x400, scoped, tag = 'input window, operand 1, single buffered']
    #allocation6 [shape = 's32[1]{0}', space=sflag, size = 0x4, scoped, tag = 'scoped memory for tpu_custom_call.1']
    #allocation7 [shape = 'u8[8192]{0}', space=vmem, size = 0x2000, scoped, tag = 'output window, operand 0, single buffered']
    %7 = vsyncpa [#allocation3], 0
    %8 = vsyncpa [#allocation6], 0
    %9 = vsyncpa [#allocation4], 0
    // Predicated region
    $region2: #{tpu_custom_call.1} parent=1 // pred_check
      _
    $region3: #{tpu_custom_call.1} parent=1 // pred_check_branch
      %11 = sbr.rel (0) target = $region5
    $region4: #{tpu_custom_call.1} parent=1 // pred_region
      %13 = vsyncadd [#allocation3], 0
      %s14 = sshll.u32 %s0, 4
      %s15 = int_to_ptr.hbm [resolvable:$true] %s14
      %s16 = sshll.u32 [#allocation2], 4
      %s17 = int_to_ptr.vmem [resolvable:$true] %s16
      %22 = dma.hbm_to_vmem [thread:$0]  %s15, 256, %s17, [#allocation3], 128, 128, 8
    $region5: #{tpu_custom_call.1} parent=1 // pred_fallthru
      _
    // Predicated region
    $region6: #{tpu_custom_call.1} parent=1 // pred_check
      _
    $region7: #{tpu_custom_call.1} parent=1 // pred_check_branch
      %24 = sbr.rel (0) target = $region9
    $region8: #{tpu_custom_call.1} parent=1 // pred_region
      %26 = vsyncadd [#allocation6], 0
      %s28 = sshll.u32 %s1, 4
      %s29 = int_to_ptr.hbm [resolvable:$true] %s28
      %s30 = sshll.u32 [#allocation5], 4
      %s31 = int_to_ptr.vmem [resolvable:$true] %s30
      %33 = dma.hbm_to_vmem [thread:$0]  %s29, 16, %s31, [#allocation6]
    $region9: #{tpu_custom_call.1} parent=1 // pred_fallthru
      _
    // Predicated region
    $region10: #{tpu_custom_call.1} parent=1 // pred_check
      _
    $region11: #{tpu_custom_call.1} parent=1 // pred_check_branch
      %35 = sbr.rel (0) target = $region13
    $region12: #{tpu_custom_call.1} parent=1 // pred_region
      %37 = dma.done [#allocation3], 256
    $region13: #{tpu_custom_call.1} parent=1 // pred_fallthru
      _
    // Predicated region
    $region14: #{tpu_custom_call.1} parent=1 // pred_check
      _
    $region15: #{tpu_custom_call.1} parent=1 // pred_check_branch
      %39 = sbr.rel (0) target = $region17
    $region16: #{tpu_custom_call.1} parent=1 // pred_region
      %41 = dma.done [#allocation6], 16
    $region17: #{tpu_custom_call.1} parent=1 // pred_fallthru
      _
    %v42 = vld [vmem:[#allocation2] sm:$0xff]
    %v43 = vld [vmem:[#allocation2 + $0x8] sm:$0xff]
    %v44 = vmul.f32 %v42, %v42
    %v45 = vmul.f32 %v43, %v43
    %46 = vadd.xlane.f32.xlu0 %v44
    %v47 = vpop.xlane.xlu0 %46
    %48 = vadd.xlane.f32.xlu0 %v45
    %v49 = vpop.xlane.xlu0 %48
    %v50 = vrcp.pop 128.0
    %v51 = vmul.f32 128.0, %v50
    %v52 = vsub.f32 1.0, %v51
    %v53 = vmul.f32 %v50, %v52
    %v54 = vadd.f32 %v50, %v53
    %vm55 = vweird.f32 %v50
    %v56 = vsel %vm55, %v50, %v54
    %v57 = vmul.f32 %v47, %v56
    %v58 = vmul.f32 %v49, %v56
    %v59 = vadd.f32 %v57, 1e-06
    %v60 = vadd.f32 %v58, 1e-06
    %v61 = vrsqrt.pop %v59
    %v62 = vmul.f32 %v61, %v59
    %v63 = vmul.f32 %v62, %v61
    %v64 = vmul.f32 0.5, %v63
    %v65 = vsub.f32 1.5, %v64
    %v66 = vmul.f32 %v61, %v65
    %vm67 = vweird.f32 %v59
    %vm68 = vweird.f32 %v61
    %vm69 = vmor %vm67, %vm68
    %v70 = vsel %vm69, %v61, %v66
    %v71 = vrsqrt.pop %v60
    %v72 = vmul.f32 %v71, %v60
    %v73 = vmul.f32 %v72, %v71
    %v74 = vmul.f32 0.5, %v73
    %v75 = vsub.f32 1.5, %v74
    %v76 = vmul.f32 %v71, %v75
    %vm77 = vweird.f32 %v60
    %vm78 = vweird.f32 %v71
    %vm79 = vmor %vm77, %vm78
    %v80 = vsel %vm79, %v71, %v76
    %v81 = vmul.f32 %v42, %v70
    %v82 = vmul.f32 %v43, %v80
    %v83 = vld [vmem:[#allocation5] sm:$0x1]
    %v85 = vperm.slane %v83, 0
    %v87 = vmul.f32 %v81, %v85
    %v88 = vmul.f32 %v82, %v85
    %89 = vst [vmem:[#allocation7] sm:$0xff] %v87
    %90 = vst [vmem:[#allocation7 + $0x8] sm:$0xff] %v88
    // Predicated region
    $region18: #{tpu_custom_call.1} parent=1 // pred_check
      _
    $region19: #{tpu_custom_call.1} parent=1 // pred_check_branch
      %92 = sbr.rel (0) target = $region21
    $region20: #{tpu_custom_call.1} parent=1 // pred_region
      %94 = vsyncadd [#allocation4], 0
      %s95 = sshll.u32 [#allocation7], 4
      %s96 = int_to_ptr.vmem [resolvable:$true] %s95
      %s97 = sshll.u32 %s2, 4
      %s98 = int_to_ptr.hbm [resolvable:$true] %s97
      %103 = dma.vmem_to_hbm [thread:$0]  %s96, 256, %s98, [#allocation4], 128, 128, 8
    $region21: #{tpu_custom_call.1} parent=1 // pred_fallthru
      _
    // Predicated region
    $region22: #{tpu_custom_call.1} parent=1 // pred_check
      _
    $region23: #{tpu_custom_call.1} parent=1 // pred_check_branch
      %105 = sbr.rel (0) target = $region25
    $region24: #{tpu_custom_call.1} parent=1 // pred_region
      %107 = dma.done [#allocation4], 256
    $region25: #{tpu_custom_call.1} parent=1 // pred_fallthru
      _
    %108 = vsyncpa [#allocation3], 1
    %109 = vsyncpa [#allocation6], 1
    %110 = vsyncpa [#allocation4], 1

</llo_original>
